<compile_context>
chip_gen: v5e
topology: v5e:2x2
jax: 0.10.0
libtpu: 0.0.40
codegen_flags: <defaults>
</compile_context>

<pallas_src>
import functools

import jax
import jax.numpy as jnp
from jax import lax
from jax.experimental import pallas as pl
from jax.experimental.pallas import tpu as pltpu


def _round_up(x, m):
    return ((x + m - 1) // m) * m


def _choose_tile_rows(batch, n_pad, tile_m):
    """Pick the row-tile size TM.

    TM is either k * n_pad for some k dividing `batch` (tile spans whole
    images, pos embedding becomes VMEM-resident) or a multiple-of-8 divisor of
    n_pad (tile is a sub-image slab, pos embedding cycles).  Prefer the largest
    TM <= tile_m that still leaves >= 2 grid steps so both v7x TensorCores get
    work; otherwise take the largest candidate.
    """
    rows = batch * n_pad
    cands = set()
    for k in range(1, batch + 1):
        if batch % k == 0 and k * n_pad <= tile_m:
            cands.add(k * n_pad)
    for d in range(1, n_pad + 1):
        if n_pad % d == 0 and d % 8 == 0 and d <= tile_m:
            cands.add(d)
    cands = sorted(cands, reverse=True)
    for tm in cands:
        if rows // tm >= 2:
            return tm
    return cands[0]


def _vit_kernel(x_ref, w_ref, pos_ref, g_ref, b_ref, o_ref, *,
                hidden, h_pad, eps):
    # x_ref:   (TM, P)      bf16 im2col patch rows for this tile
    # w_ref:   (P, H_pad)   bf16 flattened conv weight (zero-padded columns)
    # pos_ref: (TM, H_pad)  f32  pos-embed + conv bias (zero-padded columns)
    # g_ref:   (1, H_pad)   f32  LayerNorm gamma (zero-padded)
    # b_ref:   (1, H_pad)   f32  LayerNorm beta  (zero-padded)
    # o_ref:   (TM, H_pad)  bf16 output
    emb = jnp.dot(x_ref[...], w_ref[...],
                  preferred_element_type=jnp.float32)     # (TM, H_pad) f32
    emb = emb + pos_ref[...]                              # padded cols stay 0

    inv_h = 1.0 / hidden
    # Padded columns of `emb` are exactly zero (weight / pos / bias are
    # zero-padded), so the unmasked lane-sum equals the true sum over `hidden`.
    mean = jnp.sum(emb, axis=-1, keepdims=True) * inv_h
    centered = emb - mean
    # Padded columns of `centered` are exactly -mean; subtract their
    # contribution analytically (identical to the masked variance) instead of
    # building an iota + where mask every grid step.
    sumsq = jnp.sum(centered * centered, axis=-1, keepdims=True)
    var = (sumsq - (h_pad - hidden) * (mean * mean)) * inv_h
    normed = centered * lax.rsqrt(var + eps)
    o_ref[...] = (normed * g_ref[...] + b_ref[...]).astype(o_ref.dtype)


def vit_forward(x, conv_w, conv_b, pos_embed, ln_gamma, ln_beta, patch_size,
                eps=1e-5, tile_m=1024, out_dtype=jnp.bfloat16):
    """x: (B, C, H, W) NCHW.  Returns (B, N, hidden) in `out_dtype`."""
    B, C, H, W = x.shape
    ph, pw = patch_size
    nh, nw = H // ph, W // pw
    N = nh * nw
    hidden = conv_w.shape[0]
    P = C * ph * pw
    H_pad = _round_up(hidden, 128)          # lane-dense output stores
    N_pad = _round_up(N, 8)                 # per-image sublane rounding only
    rows = B * N_pad

    tm = _choose_tile_rows(B, N_pad, tile_m)
    grid = (rows // tm,)                    # exact: tm | rows by construction

    # ---- Patch extraction (== im2col of the stride==kernel conv).  Cast to
    # bf16 FIRST so the materialized transpose copy moves half the bytes.
    # TODO(synk): fold this rearrangement into the kernel (DMA NCHW slabs with
    # memory_space=pl.ANY + pltpu.einshape) to remove the extra HBM pass.
    patches = x.astype(jnp.bfloat16)
    patches = patches.reshape(B, C, nh, ph, nw, pw).transpose(0, 2, 4, 1, 3, 5)
    patches = patches.reshape(B, N, P)
    if N_pad != N:
        patches = jnp.pad(patches, ((0, 0), (0, N_pad - N), (0, 0)))
    patches = patches.reshape(rows, P)

    # Conv2d weight (hidden, C, ph, pw) -> (P, H_pad).  NOTE: the in-kernel
    # unmasked mean and the variance correction rely on the padded columns of
    # weight / pos / gamma / beta being EXACTLY zero.
    w_mat = conv_w.reshape(hidden, P).T
    w_mat = jnp.pad(w_mat, ((0, 0), (0, H_pad - hidden))).astype(jnp.bfloat16)

    # Position embedding with the conv bias folded in; kept f32 and NOT
    # replicated over the batch.  If a row tile spans k whole images, tile it
    # k times so it is VMEM-resident under a constant index_map; otherwise it
    # cycles with index_map i % (N_pad // tm).
    pos = pos_embed.reshape(N, hidden) + conv_b.reshape(1, hidden)
    pos = jnp.pad(pos, ((0, N_pad - N), (0, H_pad - hidden)))
    if tm > N_pad:
        pos = jnp.tile(pos, (tm // N_pad, 1))
    n_pos_blocks = pos.shape[0] // tm
    if n_pos_blocks == 1:
        pos_index_map = lambda i: (0, 0)                  # resident
    else:
        pos_index_map = lambda i: (i % n_pos_blocks, 0)   # cycles within image

    gamma = jnp.pad(ln_gamma, (0, H_pad - hidden)).reshape(1, H_pad)
    beta = jnp.pad(ln_beta, (0, H_pad - hidden)).reshape(1, H_pad)

    kernel = functools.partial(_vit_kernel, hidden=hidden, h_pad=H_pad, eps=eps)

    # TODO(synk): once validated on all target generations, mark the
    # constant-index operands (weight / resident pos / gamma / beta) with
    # pipeline_mode=pl.Buffered(1) to skip double-buffering them.
    out = pl.pallas_call(
        kernel,
        out_shape=jax.ShapeDtypeStruct((rows, H_pad), out_dtype),
        grid_spec=pltpu.PrefetchScalarGridSpec(
            num_scalar_prefetch=0,
            grid=grid,
            in_specs=[
                pl.BlockSpec((tm, P), lambda i: (i, 0)),        # patches
                pl.BlockSpec((P, H_pad), lambda i: (0, 0)),     # weight
                pl.BlockSpec((tm, H_pad), pos_index_map),       # pos + bias
                pl.BlockSpec((1, H_pad), lambda i: (0, 0)),     # gamma
                pl.BlockSpec((1, H_pad), lambda i: (0, 0)),     # beta
            ],
            out_specs=pl.BlockSpec((tm, H_pad), lambda i: (i, 0)),
        ),
        # Tile sizes are chosen to fit the default scoped-VMEM budgets
        # (16 MiB v5e / 32 MiB v6e / 32-of-64 MiB v7x); raise vmem_limit_bytes
        # here only if tile_m is pushed beyond ~1024 with large P / H_pad.
        compiler_params=pltpu.CompilerParams(
            dimension_semantics=("parallel",)),
    )(patches, w_mat, pos, gamma, beta)

    return out.reshape(B, N_pad, H_pad)[:, :N, :hidden]


def reference_forward(x, conv_w, conv_b, pos_embed, ln_gamma, ln_beta,
                      patch_size, eps=1e-5):
    """Pure-JAX f32 reference for validation."""
    B, C, H, W = x.shape
    ph, pw = patch_size
    nh, nw = H // ph, W // pw
    N = nh * nw
    hidden = conv_w.shape[0]
    patches = x.reshape(B, C, nh, ph, nw, pw).transpose(0, 2, 4, 1, 3, 5)
    patches = patches.reshape(B, N, C * ph * pw)
    emb = jnp.einsum("bnp,hp->bnh", patches, conv_w.reshape(hidden, -1)) + conv_b
    emb = emb + pos_embed
    mean = jnp.mean(emb, axis=-1, keepdims=True)
    var = jnp.mean((emb - mean) ** 2, axis=-1, keepdims=True)
    normed = (emb - mean) / jnp.sqrt(var + eps)
    return normed * ln_gamma + ln_beta


if __name__ == "__main__":
    # Small, self-consistent config (spatial_dims=2, classification=False):
    # in_channels=4, img_size=(16,16), patch_size=(4,4), hidden_size=32,
    # num_heads=4 (32 % 4 == 0), dropout_rate=0.0.
    B, C, H, W = 2, 4, 16, 16
    ph, pw = 4, 4
    hidden = 32
    N = (H // ph) * (W // pw)

    key = jax.random.PRNGKey(0)
    kx, kw, kb, kp = jax.random.split(key, 4)

    x = jax.random.normal(kx, (B, C, H, W), dtype=jnp.float32)
    # Conv2d(in=C, out=hidden, kernel=patch, stride=patch) parameters.
    conv_w = jax.random.normal(kw, (hidden, C, ph, pw), dtype=jnp.float32) * 0.02
    conv_b = jax.random.normal(kb, (hidden,), dtype=jnp.float32) * 0.02
    pos_embed = jax.random.normal(kp, (1, N, hidden), dtype=jnp.float32) * 0.02
    ln_gamma = jnp.ones((hidden,), dtype=jnp.float32)
    ln_beta = jnp.zeros((hidden,), dtype=jnp.float32)

    out = vit_forward(x, conv_w, conv_b, pos_embed, ln_gamma, ln_beta, (ph, pw))
    out = jax.block_until_ready(out)

    ref = reference_forward(x, conv_w, conv_b, pos_embed, ln_gamma, ln_beta,
                            (ph, pw))
    assert out.shape == (B, N, hidden), out.shape
    assert out.dtype == jnp.bfloat16, out.dtype
    # bf16 matmul inputs + bf16 output writeback -> looser tolerance vs f32 ref.
    assert jnp.allclose(out.astype(jnp.float32), ref, atol=3e-2, rtol=3e-2), \
        "mismatch vs reference"

    # TODO(synk): ViT.__init__ also builds transformer blocks / cls_token /
    # classification head, but ViT.forward never invokes the blocks and
    # classification defaults to False, so they are intentionally omitted.
    print("KERNEL_OK")
</pallas_src>

<mosaic_0001>
module attributes {stable_mosaic.version = 11 : i64} {
  func.func @_vit_kernel(%arg0: i32, %arg1: memref<16x64xbf16, #tpu.memory_space<vmem>>, %arg2: memref<64x128xbf16, #tpu.memory_space<vmem>>, %arg3: memref<16x128xf32, #tpu.memory_space<vmem>>, %arg4: memref<1x128xf32, #tpu.memory_space<vmem>>, %arg5: memref<1x128xf32, #tpu.memory_space<vmem>>, %arg6: memref<16x128xbf16, #tpu.memory_space<vmem>>) attributes {dimension_semantics = [#tpu.dimension_semantics<parallel>], iteration_bounds = array<i64: 2>, scalar_prefetch = 0 : i64, scratch_operands = 0 : i64, tpu.core_type = #tpu.core_type<tc>, window_params = [{transform_indices = @transform_0, window_bounds = array<i64: 16, 64>}, {pipeline_mode = #tpu.pipeline_mode<synchronous>, transform_indices = @transform_1, window_bounds = array<i64: 64, 128>}, {pipeline_mode = #tpu.pipeline_mode<synchronous>, transform_indices = @transform_2, window_bounds = array<i64: 16, 128>}, {pipeline_mode = #tpu.pipeline_mode<synchronous>, transform_indices = @transform_3, window_bounds = array<i64: 1, 128>}, {pipeline_mode = #tpu.pipeline_mode<synchronous>, transform_indices = @transform_4, window_bounds = array<i64: 1, 128>}, {transform_indices = @transform_5, window_bounds = array<i64: 16, 128>}]} {
    %c0 = arith.constant 0 : index
    %c0_0 = arith.constant 0 : index
    %0 = vector.load %arg1[%c0, %c0_0] : memref<16x64xbf16, #tpu.memory_space<vmem>>, vector<16x64xbf16>
    %c0_1 = arith.constant 0 : index
    %c0_2 = arith.constant 0 : index
    %1 = vector.load %arg2[%c0_1, %c0_2] : memref<64x128xbf16, #tpu.memory_space<vmem>>, vector<64x128xbf16>
    %cst = arith.constant dense<0.000000e+00> : vector<16x128xf32>
    %2 = tpu.matmul %0, %1, %cst {dimension_numbers = #tpu.dot_dimension_numbers<[1], [0], [0], [1], [0, 0, 1, 1], [], []>} : vector<16x64xbf16>, vector<64x128xbf16>, vector<16x128xf32> -> vector<16x128xf32>
    %c0_3 = arith.constant 0 : index
    %c0_4 = arith.constant 0 : index
    %3 = vector.load %arg3[%c0_3, %c0_4] : memref<16x128xf32, #tpu.memory_space<vmem>>, vector<16x128xf32>
    %4 = arith.addf %2, %3 : vector<16x128xf32>
    %cst_5 = arith.constant dense<0.000000e+00> : vector<16xf32>
    %5 = vector.multi_reduction <add>, %4, %cst_5 [1] : vector<16x128xf32> to vector<16xf32>
    %6 = vector.shape_cast %5 : vector<16xf32> to vector<16x1xf32>
    %cst_6 = arith.constant 3.125000e-02 : f32
    %7 = vector.broadcast %cst_6 : f32 to vector<16x1xf32>
    %8 = arith.mulf %6, %7 : vector<16x1xf32>
    %9 = vector.broadcast %8 : vector<16x1xf32> to vector<16x128xf32>
    %10 = arith.subf %4, %9 : vector<16x128xf32>
    %11 = arith.mulf %10, %10 : vector<16x128xf32>
    %cst_7 = arith.constant dense<0.000000e+00> : vector<16xf32>
    %12 = vector.multi_reduction <add>, %11, %cst_7 [1] : vector<16x128xf32> to vector<16xf32>
    %13 = vector.shape_cast %12 : vector<16xf32> to vector<16x1xf32>
    %14 = arith.mulf %8, %8 : vector<16x1xf32>
    %cst_8 = arith.constant 9.600000e+01 : f32
    %15 = vector.broadcast %cst_8 : f32 to vector<16x1xf32>
    %16 = arith.mulf %15, %14 : vector<16x1xf32>
    %17 = arith.subf %13, %16 : vector<16x1xf32>
    %cst_9 = arith.constant 3.125000e-02 : f32
    %18 = vector.broadcast %cst_9 : f32 to vector<16x1xf32>
    %19 = arith.mulf %17, %18 : vector<16x1xf32>
    %cst_10 = arith.constant 9.99999974E-6 : f32
    %20 = vector.broadcast %cst_10 : f32 to vector<16x1xf32>
    %21 = arith.addf %19, %20 : vector<16x1xf32>
    %22 = math.rsqrt %21 : vector<16x1xf32>
    %23 = vector.broadcast %22 : vector<16x1xf32> to vector<16x128xf32>
    %24 = arith.mulf %10, %23 : vector<16x128xf32>
    %c0_11 = arith.constant 0 : index
    %c0_12 = arith.constant 0 : index
    %25 = vector.load %arg4[%c0_11, %c0_12] : memref<1x128xf32, #tpu.memory_space<vmem>>, vector<1x128xf32>
    %26 = vector.broadcast %25 : vector<1x128xf32> to vector<16x128xf32>
    %27 = arith.mulf %24, %26 : vector<16x128xf32>
    %c0_13 = arith.constant 0 : index
    %c0_14 = arith.constant 0 : index
    %28 = vector.load %arg5[%c0_13, %c0_14] : memref<1x128xf32, #tpu.memory_space<vmem>>, vector<1x128xf32>
    %29 = vector.broadcast %28 : vector<1x128xf32> to vector<16x128xf32>
    %30 = arith.addf %27, %29 : vector<16x128xf32>
    %31 = arith.truncf %30 : vector<16x128xf32> to vector<16x128xbf16>
    %c0_15 = arith.constant 0 : index
    %c0_16 = arith.constant 0 : index
    %32 = vector.load %arg6[%c0_15, %c0_16] : memref<16x128xbf16, #tpu.memory_space<vmem>>, vector<16x128xbf16>
    tpu.vector_store %arg6[%c0_15, %c0_16], %31 {strides = array<i32>} : memref<16x128xbf16, #tpu.memory_space<vmem>>, vector<16x128xbf16>,
    return
  }
  func.func @transform_0(%arg0: i32) -> (i32, i32) {
    %c0_i32 = arith.constant 0 : i32
    %c0_i32_0 = arith.constant 0 : i32
    return %arg0, %c0_i32 : i32, i32
  }
  func.func @transform_1(%arg0: i32) -> (i32, i32) {
    %c0_i32 = arith.constant 0 : i32
    %c0_i32_0 = arith.constant 0 : i32
    %c0_i32_1 = arith.constant 0 : i32
    return %c0_i32, %c0_i32_0 : i32, i32
  }
  func.func @transform_2(%arg0: i32) -> (i32, i32) {
    %c0_i32 = arith.constant 0 : i32
    %c0_i32_0 = arith.constant 0 : i32
    %c0_i32_1 = arith.constant 0 : i32
    return %c0_i32, %c0_i32_0 : i32, i32
  }
  func.func @transform_3(%arg0: i32) -> (i32, i32) {
    %c0_i32 = arith.constant 0 : i32
    %c0_i32_0 = arith.constant 0 : i32
    %c0_i32_1 = arith.constant 0 : i32
    return %c0_i32, %c0_i32_0 : i32, i32
  }
  func.func @transform_4(%arg0: i32) -> (i32, i32) {
    %c0_i32 = arith.constant 0 : i32
    %c0_i32_0 = arith.constant 0 : i32
    %c0_i32_1 = arith.constant 0 : i32
    return %c0_i32, %c0_i32_0 : i32, i32
  }
  func.func @transform_5(%arg0: i32) -> (i32, i32) {
    %c0_i32 = arith.constant 0 : i32
    %c0_i32_0 = arith.constant 0 : i32
    return %arg0, %c0_i32 : i32, i32
  }
}

</mosaic_0001>

<llo_original>
// kernel: tpu_custom_call.1
$region0: #{tpu_custom_call.1}
  #allocation0 [shape = 'u32[]', space=smem, size = 0x4, offset = 0x4, fixed_abs, tag = 'smem constant byte address 0x4 - core index']
  #allocation1 [shape = 'u32[72,128]{1,0:T(1,128)}', space=vmem, size = 0x9000, scoped, tag = 'internal scratch']
  %s0 = inlined_call_operand.hbm [shape: bf16[32,64], index: 0, kind: input, shape index: {}]
  %s1 = inlined_call_operand.hbm [shape: bf16[64,128], index: 1, kind: input, shape index: {}]
  %s2 = inlined_call_operand.hbm [shape: f32[16,128], index: 2, kind: input, shape index: {}]
  %s3 = inlined_call_operand.vmem [shape: f32[1,128], index: 3, kind: input, shape index: {}]
  %s4 = inlined_call_operand.vmem [shape: f32[1,128], index: 4, kind: input, shape index: {}]
  %s5 = inlined_call_operand.hbm [shape: bf16[32,128], index: 5, kind: output, shape index: {}]
  %s6 = sld [smem:[#allocation0]]
  $region65: #{tpu_custom_call.1} parent=0
    _
  %s8 = ssub.s32 1, %s6
  %s9 = scalar_select 0, %s8, %s6
  $region1: #{tpu_custom_call.1} parent=0
    #allocation2 [shape = 'u8[8192]{0}', space=vmem, size = 0x2000, scoped, tag = 'input window, operand 0']
    #allocation3 [shape = 's32[2]{0}', space=sflag, size = 0x8, scoped, tag = 'scoped memory for tpu_custom_call.1']
    #allocation4 [shape = 's32[2]{0}', space=sflag, size = 0x8, scoped, tag = 'scoped memory for tpu_custom_call.1']
    #allocation5 [shape = 'u8[16384]{0}', space=vmem, size = 0x4000, scoped, tag = 'input window, operand 1, single buffered']
    #allocation6 [shape = 's32[1]{0}', space=sflag, size = 0x4, scoped, tag = 'scoped memory for tpu_custom_call.1']
    #allocation7 [shape = 'u8[8192]{0}', space=vmem, size = 0x2000, scoped, tag = 'input window, operand 2, single buffered']
    #allocation8 [shape = 'u8[8192]{0}', space=vmem, size = 0x2000, scoped, tag = 'output window, operand 0']
    %10 = vsyncpa [#allocation3], 0
    %s11 = scalar_lea.sflag [#allocation3], 1
    %12 = vsyncpa %s11, 0
    %13 = vsyncpa [#allocation6], 0
    %14 = vsyncpa [#allocation4], 0
    %s15 = scalar_lea.sflag [#allocation4], 1
    %16 = vsyncpa %s15, 0
    loop: start=0, step=1, limit=4
    $region2: #{tpu_custom_call.1} parent=1 // loop_pre_header
      _
    $region3: #{tpu_custom_call.1} parent=1 // loop_header
      %s18 = sphi 0, %s22
      %p19 = scmp.ge.s32.totalorder %s18, 4
      %s28 = sphi 0, %s30
      %s31 = sphi 0, %s28
      %s32 = sphi 0, %s31
      %s48 = sphi 0, %s32
      %s52 = sphi 0, %s52
      %s54 = sphi 0, %s52
      %s55 = sphi 0, %s54
      %s69 = sphi 0, %s55
      %s73 = sphi 0, %s73
      %s75 = sphi 0, %s73
      %s76 = sphi 0, %s75
      %s90 = sphi 0, %s76
      %s94 = sphi 0, %s94
      %s96 = sphi 0, %s94
      %s97 = sphi 0, %s96
      %s111 = sphi 0, %s97
      %s115 = sphi 0, %s115
      %s117 = sphi 0, %s115
      %s118 = sphi 0, %s117
      %s132 = sphi 0, %s118
      %s138 = sphi 0, %s140
      %s141 = sphi 0, %s138
      %s142 = sphi 0, %s141
      %s158 = sphi 0, %s142
    $region4: #{tpu_custom_call.1} parent=1 // loop_header_branch
      %21 = sbr.rel (%p19) target = $region8
    $region5: #{tpu_custom_call.1} parent=1 // loop_body
      %s23 = ssub.s32 %s18, 1
      %s24 = ssub.s32 %s18, 2
      %s25 = sadd.s32 %s18, 1
      %s26 = ssub.s32 %s18, %s25
      %p27 = scmp.eq.s32.totalorder %s26, 0
      %s29 = sadd.s32 %s28, 1
      %s30 = scalar_select %p27, %s28, %s29
      %p33 = pneg %p27
      %p34 = scmp.eq.s32.totalorder %s18, 1
      %p35 = por %p33, %p34
      %p36 = scmp.ne.s32.totalorder %s28, %s31
      %p37 = scmp.eq.s32.totalorder %s18, 0
      %p38 = por %p36, %p37
      %p39 = scmp.ne.s32.totalorder %s28, %s31
      %p40 = scmp.eq.s32.totalorder %s23, 1
      %p41 = por %p39, %p40
      %p42 = scmp.ne.s32.totalorder %s31, %s32
      %p43 = scmp.eq.s32.totalorder %s23, 0
      %p44 = por %p42, %p43
      %p45 = scmp.ne.s32.totalorder %s31, %s32
      %p46 = scmp.eq.s32.totalorder %s24, 1
      %p47 = por %p45, %p46
      %p49 = scmp.ne.s32.totalorder %s32, %s48
      %p50 = scmp.eq.s32.totalorder %s24, 0
      %p51 = por %p49, %p50
      %s53 = sadd.s32 %s52, 1
      %p56 = scmp.eq.s32.totalorder %s18, 1
      %p57 = scmp.ne.s32.totalorder %s52, %s54
      %p58 = scmp.eq.s32.totalorder %s18, 0
      %p59 = por %p57, %p58
      %p60 = scmp.ne.s32.totalorder %s52, %s54
      %p61 = scmp.eq.s32.totalorder %s23, 1
      %p62 = por %p60, %p61
      %p63 = scmp.ne.s32.totalorder %s54, %s55
      %p64 = scmp.eq.s32.totalorder %s23, 0
      %p65 = por %p63, %p64
      %p66 = scmp.ne.s32.totalorder %s54, %s55
      %p67 = scmp.eq.s32.totalorder %s24, 1
      %p68 = por %p66, %p67
      %p70 = scmp.ne.s32.totalorder %s55, %s69
      %p71 = scmp.eq.s32.totalorder %s24, 0
      %p72 = por %p70, %p71
      %s74 = sadd.s32 %s73, 1
      %p77 = scmp.eq.s32.totalorder %s18, 1
      %p78 = scmp.ne.s32.totalorder %s73, %s75
      %p79 = scmp.eq.s32.totalorder %s18, 0
      %p80 = por %p78, %p79
      %p81 = scmp.ne.s32.totalorder %s73, %s75
      %p82 = scmp.eq.s32.totalorder %s23, 1
      %p83 = por %p81, %p82
      %p84 = scmp.ne.s32.totalorder %s75, %s76
      %p85 = scmp.eq.s32.totalorder %s23, 0
      %p86 = por %p84, %p85
      %p87 = scmp.ne.s32.totalorder %s75, %s76
      %p88 = scmp.eq.s32.totalorder %s24, 1
      %p89 = por %p87, %p88
      %p91 = scmp.ne.s32.totalorder %s76, %s90
      %p92 = scmp.eq.s32.totalorder %s24, 0
      %p93 = por %p91, %p92
      %s95 = sadd.s32 %s94, 1
      %p98 = scmp.eq.s32.totalorder %s18, 1
      %p99 = scmp.ne.s32.totalorder %s94, %s96
      %p100 = scmp.eq.s32.totalorder %s18, 0
      %p101 = por %p99, %p100
      %p102 = scmp.ne.s32.totalorder %s94, %s96
      %p103 = scmp.eq.s32.totalorder %s23, 1
      %p104 = por %p102, %p103
      %p105 = scmp.ne.s32.totalorder %s96, %s97
      %p106 = scmp.eq.s32.totalorder %s23, 0
      %p107 = por %p105, %p106
      %p108 = scmp.ne.s32.totalorder %s96, %s97
      %p109 = scmp.eq.s32.totalorder %s24, 1
      %p110 = por %p108, %p109
      %p112 = scmp.ne.s32.totalorder %s97, %s111
      %p113 = scmp.eq.s32.totalorder %s24, 0
      %p114 = por %p112, %p113
      %s116 = sadd.s32 %s115, 1
      %p119 = scmp.eq.s32.totalorder %s18, 1
      %p120 = scmp.ne.s32.totalorder %s115, %s117
      %p121 = scmp.eq.s32.totalorder %s18, 0
      %p122 = por %p120, %p121
      %p123 = scmp.ne.s32.totalorder %s115, %s117
      %p124 = scmp.eq.s32.totalorder %s23, 1
      %p125 = por %p123, %p124
      %p126 = scmp.ne.s32.totalorder %s117, %s118
      %p127 = scmp.eq.s32.totalorder %s23, 0
      %p128 = por %p126, %p127
      %p129 = scmp.ne.s32.totalorder %s117, %s118
      %p130 = scmp.eq.s32.totalorder %s24, 1
      %p131 = por %p129, %p130
      %p133 = scmp.ne.s32.totalorder %s118, %s132
      %p134 = scmp.eq.s32.totalorder %s24, 0
      %p135 = por %p133, %p134
      %s136 = ssub.s32 %s18, %s25
      %p137 = scmp.eq.s32.totalorder %s136, 0
      %s139 = sadd.s32 %s138, 1
      %s140 = scalar_select %p137, %s138, %s139
      %p143 = pneg %p137
      %p144 = scmp.eq.s32.totalorder %s18, 1
      %p145 = por %p143, %p144
      %p146 = scmp.ne.s32.totalorder %s138, %s141
      %p147 = scmp.eq.s32.totalorder %s18, 0
      %p148 = por %p146, %p147
      %p149 = scmp.ne.s32.totalorder %s138, %s141
      %p150 = scmp.eq.s32.totalorder %s23, 1
      %p151 = por %p149, %p150
      %p152 = scmp.ne.s32.totalorder %s141, %s142
      %p153 = scmp.eq.s32.totalorder %s23, 0
      %p154 = por %p152, %p153
      %p155 = scmp.ne.s32.totalorder %s141, %s142
      %p156 = scmp.eq.s32.totalorder %s24, 1
      %p157 = por %p155, %p156
      %p159 = scmp.ne.s32.totalorder %s142, %s158
      %p160 = scmp.eq.s32.totalorder %s24, 0
      %p161 = por %p159, %p160
      %p162 = scmp.le.s32.totalorder 1, %s18
      %p163 = scmp.lt.s32.totalorder %s18, 3
      %p164 = pnand %p162, %p163
      %p165 = pneg %p164
      // Predicated region
      $region9: #{tpu_custom_call.1} parent=5 // pred_check
        _
      $region10: #{tpu_custom_call.1} parent=5 // pred_check_branch
        %167 = sbr.rel (%p164) target = $region12
      $region11: #{tpu_custom_call.1} parent=5 // pred_region
        %s168 = ssub.s32 %s18, 1
        // Predicated region
        $region13: #{tpu_custom_call.1} parent=11 // pred_check
          %p169 = pneg %p65
        $region14: #{tpu_custom_call.1} parent=11 // pred_check_branch
          %171 = sbr.rel (%p169) target = $region16
        $region15: #{tpu_custom_call.1} parent=11 // pred_region
          %173 = vsyncadd [#allocation6], 0
          %s174 = sshll.u32 %s1, 4
          %s175 = int_to_ptr.hbm [resolvable:$true] %s174
          %s176 = sshll.u32 [#allocation5], 4
          %s177 = int_to_ptr.vmem [resolvable:$true] %s176
          %182 = dma.hbm_to_vmem [thread:$0]  %s175, 512, %s177, [#allocation6], 64, 64, 4
        $region16: #{tpu_custom_call.1} parent=11 // pred_fallthru
          _
        // Predicated region
        $region17: #{tpu_custom_call.1} parent=11 // pred_check
          %p183 = pneg %p86
        $region18: #{tpu_custom_call.1} parent=11 // pred_check_branch
          %185 = sbr.rel (%p183) target = $region20
        $region19: #{tpu_custom_call.1} parent=11 // pred_region
          %187 = vsyncadd [#allocation6], 0
          %s188 = sshll.u32 %s2, 4
          %s189 = int_to_ptr.hbm [resolvable:$true] %s188
          %s190 = sshll.u32 [#allocation7], 4
          %s191 = int_to_ptr.vmem [resolvable:$true] %s190
          %196 = dma.hbm_to_vmem [thread:$0]  %s189, 256, %s191, [#allocation6], 128, 128, 8
        $region20: #{tpu_custom_call.1} parent=11 // pred_fallthru
          _
        // Predicated region
        $region21: #{tpu_custom_call.1} parent=11 // pred_check
          %p197 = pneg %p107
        $region22: #{tpu_custom_call.1} parent=11 // pred_check_branch
          %199 = sbr.rel (%p197) target = $region24
        $region23: #{tpu_custom_call.1} parent=11 // pred_region
          _
        $region24: #{tpu_custom_call.1} parent=11 // pred_fallthru
          _
        // Predicated region
        $region25: #{tpu_custom_call.1} parent=11 // pred_check
          %p200 = pneg %p128
        $region26: #{tpu_custom_call.1} parent=11 // pred_check_branch
          %202 = sbr.rel (%p200) target = $region28
        $region27: #{tpu_custom_call.1} parent=11 // pred_region
          _
        $region28: #{tpu_custom_call.1} parent=11 // pred_fallthru
          _
      $region12: #{tpu_custom_call.1} parent=5 // pred_fallthru
        _
      %p203 = scmp.lt.s32.totalorder %s18, 2
      // Predicated region
      $region29: #{tpu_custom_call.1} parent=5 // pred_check
        %p204 = pneg %p203
      $region30: #{tpu_custom_call.1} parent=5 // pred_check_branch
        %206 = sbr.rel (%p204) target = $region32
      $region31: #{tpu_custom_call.1} parent=5 // pred_region
        // Predicated region
        $region33: #{tpu_custom_call.1} parent=31 // pred_check
          %p207 = pneg %p38
        $region34: #{tpu_custom_call.1} parent=31 // pred_check_branch
          %209 = sbr.rel (%p207) target = $region36
        $region35: #{tpu_custom_call.1} parent=31 // pred_region
          %s210 = sand.u32 %s28, 1
          %s211 = scalar_lea.sflag [#allocation3], %s210
          %s212 = sand.u32 %s28, 1
          %s213 = smul.addr %s212, 8
          %s214 = scalar_lea.vmem [#allocation2], %s213
          %s215 = smul.u32 2, %s18
          %217 = vsyncadd %s211, 0
          %s218 = smul.addr %s215, 4
          %s219 = scalar_lea.hbm %s0, %s218
          %s220 = sshll.u32 %s219, 4
          %s221 = int_to_ptr.hbm [resolvable:$true] %s220
          %s222 = sshll.u32 %s214, 4
          %s223 = int_to_ptr.vmem [resolvable:$true] %s222
          %228 = dma.hbm_to_vmem [thread:$0]  %s221, 128, %s223, %s211, 64, 64, 4
        $region36: #{tpu_custom_call.1} parent=31 // pred_fallthru
          _
      $region32: #{tpu_custom_call.1} parent=5 // pred_fallthru
        _
      %p229 = scmp.le.s32.totalorder 1, %s18
      %p230 = scmp.lt.s32.totalorder %s18, 3
      %p231 = pnand %p229, %p230
      %p232 = pneg %p231
      // Predicated region
      $region37: #{tpu_custom_call.1} parent=5 // pred_check
        _
      $region38: #{tpu_custom_call.1} parent=5 // pred_check_branch
        %234 = sbr.rel (%p231) target = $region40
      $region39: #{tpu_custom_call.1} parent=5 // pred_region
        %s235 = ssub.s32 %s18, 1
        %s236 = sand.u32 %s31, 1
        %s237 = scalar_lea.sflag [#allocation3], %s236
        %s238 = sand.u32 %s31, 1
        %s239 = smul.addr %s238, 8
        %s240 = scalar_lea.vmem [#allocation2], %s239
        // Predicated region
        $region41: #{tpu_custom_call.1} parent=39 // pred_check
          %p241 = pneg %p44
        $region42: #{tpu_custom_call.1} parent=39 // pred_check_branch
          %243 = sbr.rel (%p241) target = $region44
        $region43: #{tpu_custom_call.1} parent=39 // pred_region
          %245 = dma.done %s237, 128
        $region44: #{tpu_custom_call.1} parent=39 // pred_fallthru
          _
        // Predicated region
        $region45: #{tpu_custom_call.1} parent=39 // pred_check
          %p246 = pneg %p65
        $region46: #{tpu_custom_call.1} parent=39 // pred_check_branch
          %248 = sbr.rel (%p246) target = $region48
        $region47: #{tpu_custom_call.1} parent=39 // pred_region
          %250 = dma.done [#allocation6], 512
        $region48: #{tpu_custom_call.1} parent=39 // pred_fallthru
          _
        // Predicated region
        $region49: #{tpu_custom_call.1} parent=39 // pred_check
          %p251 = pneg %p86
        $region50: #{tpu_custom_call.1} parent=39 // pred_check_branch
          %253 = sbr.rel (%p251) target = $region52
        $region51: #{tpu_custom_call.1} parent=39 // pred_region
          %255 = dma.done [#allocation6], 256
        $region52: #{tpu_custom_call.1} parent=39 // pred_fallthru
          _
        %s256 = sand.u32 %s31, 1
        %s257 = scalar_lea.sflag [#allocation3], %s256
        %s258 = sand.u32 %s31, 1
        %s259 = smul.addr %s258, 8
        %s260 = scalar_lea.vmem [#allocation2], %s259
        %p261 = pneg %p44
        %p262 = pneg %p41
        %p263 = pneg %p65
        %p264 = pneg %p62
        %p265 = pneg %p86
        %p266 = pneg %p83
        %p267 = pneg %p107
        %p268 = pneg %p104
        %p269 = pneg %p128
        %p270 = pneg %p125
        %p271 = pneg %p154
        %p272 = pneg %p151
        %s273 = sand.u32 %s141, 1
        %s274 = scalar_lea.sflag [#allocation4], %s273
        %s275 = sand.u32 %s141, 1
        %s276 = smul.addr %s275, 8
        %s277 = scalar_lea.vmem [#allocation8], %s276
        %s278 = smul.u32 2, %s23
        %s279 = smul.u32 2, %s23
        %v281 = vld [vmem:[%s240] sm:$0xf]
        %v282 = vld [vmem:[%s240 + $0x4] sm:$0xf]
        %v283 = vld [vmem:[#allocation5] sm:$0xf]
        %v284 = vld [vmem:[#allocation5 + $0x4] sm:$0xf]
        %v285 = vld [vmem:[#allocation5 + $0x8] sm:$0xf]
        %v286 = vld [vmem:[#allocation5 + $0xc] sm:$0xf]
        %v287 = vld [vmem:[#allocation5 + $0x10] sm:$0xf]
        %v288 = vld [vmem:[#allocation5 + $0x14] sm:$0xf]
        %v289 = vld [vmem:[#allocation5 + $0x18] sm:$0xf]
        %v290 = vld [vmem:[#allocation5 + $0x1c] sm:$0xf]
        %v291 = vld [vmem:[#allocation7] sm:$0xff]
        %v292 = vld [vmem:[#allocation7 + $0x8] sm:$0xff]
        %v295 = vunpack.c.l.b16 %v281
        %v296 = vunpack.c.l.b16 %v282
        %v297 = vpack.c.b16 %v296, %v295
        %v306 = vunpack.c.l.b16 %v283
        %v307 = vunpack.c.l.b16 %v284
        %v308 = vunpack.c.l.b16 %v285
        %v309 = vunpack.c.l.b16 %v286
        %v310 = vunpack.c.l.b16 %v287
        %v311 = vunpack.c.l.b16 %v288
        %v312 = vunpack.c.l.b16 %v289
        %v313 = vunpack.c.l.b16 %v290
        %v314 = vpack.c.b16 %v307, %v306
        %v315 = vpack.c.b16 %v309, %v308
        %v316 = vpack.c.b16 %v311, %v310
        %v317 = vpack.c.b16 %v313, %v312
        %vm322 = vcmask 523264
        %v324 = vsel %vm322, %v297, 0
        %326 = vmatpush.bf16.msra.mxu0 0
        %327 = vmatpush.bf16.msra.mxu0 0
        %328 = vmatpush.bf16.msra.mxu0 0
        %329 = vmatpush.bf16.msra.mxu0 0
        %330 = vmatpush.bf16.msra.mxu0 %v317
        %331 = vmatpush.bf16.msra.mxu0 %v316
        %332 = vmatpush.bf16.msra.mxu0 %v315
        %333 = vmatpush.bf16.msra.mxu0 %v314
        %334 = vmatmul.bf16.gmra.mxu0 %v324
        %v335 = vpop.f32.mrf.mxu0
        %v336 = vadd.f32 %v291, %v335
        %v337 = vpop.f32.mrf.mxu0
        %v338 = vadd.f32 %v292, %v337
        %339 = vdwg.mxu0
        %340 = vadd.xlane.f32.xlu0 %v336
        %v341 = vpop.xlane.xlu0 %340
        %342 = vadd.xlane.f32.xlu0 %v338
        %v343 = vpop.xlane.xlu0 %342
        %v344 = vmul.f32 %v341, 0.03125
        %v345 = vmul.f32 %v343, 0.03125
        %v346 = vsub.f32 %v336, %v344
        %v347 = vsub.f32 %v338, %v345
        %v348 = vmul.f32 %v346, %v346
        %v349 = vmul.f32 %v347, %v347
        %350 = vadd.xlane.f32.xlu0 %v348
        %v351 = vpop.xlane.xlu0 %350
        %352 = vadd.xlane.f32.xlu0 %v349
        %v353 = vpop.xlane.xlu0 %352
        %v354 = vmul.f32 %v344, %v344
        %v355 = vmul.f32 %v345, %v345
        %v356 = vmul.f32 %v354, 96.0
        %v357 = vmul.f32 %v355, 96.0
        %v358 = vsub.f32 %v351, %v356
        %v359 = vsub.f32 %v353, %v357
        %v360 = vmul.f32 %v358, 0.03125
        %v361 = vmul.f32 %v359, 0.03125
        %v362 = vadd.f32 %v360, 1e-05
        %v363 = vadd.f32 %v361, 1e-05
        %v364 = vrsqrt.pop %v362
        %v365 = vmul.f32 %v364, %v362
        %v366 = vmul.f32 %v365, %v364
        %v367 = vmul.f32 0.5, %v366
        %v368 = vsub.f32 1.5, %v367
        %v369 = vmul.f32 %v364, %v368
        %vm370 = vweird.f32 %v362
        %vm371 = vweird.f32 %v364
        %vm372 = vmor %vm370, %vm371
        %v373 = vsel %vm372, %v364, %v369
        %v374 = vrsqrt.pop %v363
        %v375 = vmul.f32 %v374, %v363
        %v376 = vmul.f32 %v375, %v374
        %v377 = vmul.f32 0.5, %v376
        %v378 = vsub.f32 1.5, %v377
        %v379 = vmul.f32 %v374, %v378
        %vm380 = vweird.f32 %v363
        %vm381 = vweird.f32 %v374
        %vm382 = vmor %vm380, %vm381
        %v383 = vsel %vm382, %v374, %v379
        %v384 = vmul.f32 %v346, %v373
        %v385 = vmul.f32 %v347, %v383
        %v386 = vld [vmem:[%s3] sm:$0x1]
        %v388 = vperm.slane %v386, 0
        %v390 = vmul.f32 %v384, %v388
        %v391 = vmul.f32 %v385, %v388
        %v392 = vld [vmem:[%s4] sm:$0x1]
        %v394 = vperm.slane %v392, 0
        %v396 = vadd.f32 %v390, %v394
        %v397 = vadd.f32 %v391, %v394
        %v398 = vpack.c.bf16 %v396, %v396
        %v399 = vpack.c.bf16 %v397, %v397
        %400 = vst [vmem:[%s277] sm:$0xf] %v398
        %401 = vst [vmem:[%s277 + $0x4] sm:$0xf] %v399
        %s402 = sand.u32 %s141, 1
        %s403 = scalar_lea.sflag [#allocation4], %s402
        %s404 = sand.u32 %s141, 1
        %s405 = smul.addr %s404, 8
        %s406 = scalar_lea.vmem [#allocation8], %s405
        // Predicated region
        $region53: #{tpu_custom_call.1} parent=39 // pred_check
          %p407 = pneg %p151
        $region54: #{tpu_custom_call.1} parent=39 // pred_check_branch
          %409 = sbr.rel (%p407) target = $region56
        $region55: #{tpu_custom_call.1} parent=39 // pred_region
          %s410 = smul.u32 2, %s23
          %412 = vsyncadd %s403, 0
          %s413 = smul.addr %s410, 4
          %s414 = scalar_lea.hbm %s5, %s413
          %s415 = sshll.u32 %s406, 4
          %s416 = int_to_ptr.vmem [resolvable:$true] %s415
          %s417 = sshll.u32 %s414, 4
          %s418 = int_to_ptr.hbm [resolvable:$true] %s417
          %423 = dma.vmem_to_hbm [thread:$0]  %s416, 128, %s418, %s403, 64, 64, 4
        $region56: #{tpu_custom_call.1} parent=39 // pred_fallthru
          _
      $region40: #{tpu_custom_call.1} parent=5 // pred_fallthru
        _
      %p424 = scmp.le.s32.totalorder 2, %s18
      // Predicated region
      $region57: #{tpu_custom_call.1} parent=5 // pred_check
        %p425 = pneg %p424
      $region58: #{tpu_custom_call.1} parent=5 // pred_check_branch
        %427 = sbr.rel (%p425) target = $region60
      $region59: #{tpu_custom_call.1} parent=5 // pred_region
        %s428 = ssub.s32 %s18, 2
        // Predicated region
        $region61: #{tpu_custom_call.1} parent=59 // pred_check
          %p429 = pneg %p157
        $region62: #{tpu_custom_call.1} parent=59 // pred_check_branch
          %431 = sbr.rel (%p429) target = $region64
        $region63: #{tpu_custom_call.1} parent=59 // pred_region
          %s432 = sand.u32 %s142, 1
          %s433 = scalar_lea.sflag [#allocation4], %s432
          %s434 = sand.u32 %s142, 1
          %s435 = smul.addr %s434, 8
          %s436 = scalar_lea.vmem [#allocation8], %s435
          %438 = dma.done %s433, 128
        $region64: #{tpu_custom_call.1} parent=59 // pred_fallthru
          _
      $region60: #{tpu_custom_call.1} parent=5 // pred_fallthru
        _
    $region6: #{tpu_custom_call.1} parent=1 // loop_footer
      %s22 = sadd.s32 1, %s18
    $region7: #{tpu_custom_call.1} parent=1 // loop_footer_branch
      %17 = sbr.rel target = $region3
    $region8: #{tpu_custom_call.1} parent=1 // loop_exit
      _
    %439 = vsyncpa [#allocation3], 1
    %s440 = scalar_lea.sflag [#allocation3], 1
    %441 = vsyncpa %s440, 1
    %442 = vsyncpa [#allocation6], 1
    %443 = vsyncpa [#allocation4], 1
    %s444 = scalar_lea.sflag [#allocation4], 1
    %445 = vsyncpa %s444, 1

</llo_original>
